<compile_context>
chip_gen: v7x
topology: tpu7x:2x2x1
jax: 0.10.0
libtpu: 0.0.40
codegen_flags: <defaults>
</compile_context>

<pallas_src>
import jax
import jax.numpy as jnp
import numpy as np
from jax.experimental import pallas as pl
from jax.experimental.pallas import tpu as pltpu


# ----------------- module_01 MLP + hoisted gate projection -------------------
def mlp_proj_kernel(x_ref, w1_ref, b1_ref, w2_ref, b2_ref, w3_ref, b3_ref,
                    w4_ref, b4_ref, wxg_ref, bxg_ref, gi_ref):
    bf16 = jnp.bfloat16
    f32 = jnp.float32
    h = jax.nn.relu(jnp.dot(x_ref[...].astype(bf16), w1_ref[...],
                            preferred_element_type=f32) + b1_ref[...])
    h = jax.nn.relu(jnp.dot(h.astype(bf16), w2_ref[...],
                            preferred_element_type=f32) + b2_ref[...])
    h = jax.nn.relu(jnp.dot(h.astype(bf16), w3_ref[...],
                            preferred_element_type=f32) + b3_ref[...])
    feat = jax.nn.relu(jnp.dot(h.astype(bf16), w4_ref[...],
                               preferred_element_type=f32) + b4_ref[...])
    # Hoisted GRU input projection: kron(I_n_bins, W_gate) block-diagonal, so
    # the output columns are slot-major with [r|z|n] inside each time slot.
    # b_ih (all gates) and b_hh (r, z) are pre-folded into the bias.
    gi = jnp.dot(feat.astype(bf16), wxg_ref[...],
                 preferred_element_type=f32) + bxg_ref[...]
    gi_ref[...] = gi.astype(gi_ref.dtype)        # ship to stage 2 in bf16


# ------------------- chunked GRU recurrence + module_02 ----------------------
def gru_chunk_kernel(slab_ref, whh_ref, bhn_ref, wp_ref, wm1_ref, bm1_ref,
                     wm2m_ref, wm2s_ref, bm2m_ref, bm2s_ref,
                     m_ref, s_ref, p_ref, h_scr, prev_scr):
    TC, BT, P = slab_ref.shape
    n_sub = m_ref.shape[0]                 # TC // TG
    TG = m_ref.shape[2]                    # 128 lanes (one vreg of accumulator)
    H = whh_ref.shape[0]
    H2 = 2 * H
    H3 = 3 * H
    f32 = jnp.float32
    bf16 = jnp.bfloat16

    @pl.when(pl.program_id(1) == 0)
    def _():
        h_scr[...] = jnp.zeros_like(h_scr)
        prev_scr[...] = jnp.zeros_like(prev_scr)

    # Small recurrent weights, loaded once per chunk; matmul inputs in bf16.
    whh = whh_ref[...]                     # (H, 3H) bf16, fused [r|z|n]
    wm1 = wm1_ref[...]                     # (H, H)  bf16
    bhn = bhn_ref[...]                     # (1, H)  f32
    wp = wp_ref[...]                       # (1, 3H) f32
    wp_rz = wp[:, :H2]
    wp_n = wp[:, H2:H3]
    bm1 = bm1_ref[...]
    wm2m = wm2m_ref[...]
    wm2s = wm2s_ref[...]
    bm2m = bm2m_ref[...]
    bm2s = bm2s_ref[...]

    lane = jax.lax.broadcasted_iota(jnp.int32, (BT, TG), 1)
    acc0 = jnp.zeros((BT, TG), f32)

    @pl.loop(0, n_sub)
    def _(sub):
        def step(k, carry):
            h, prev, m_acc, s_acc, p_acc = carry
            # One dense (BT, P) bf16 load per step: [r|z|n|noise|pad] packed.
            row = slab_ref[sub * TG + k].astype(f32)
            gi_rz = row[:, :H2]
            gi_n = row[:, H2:H3]
            nz = row[:, H3:H3 + 1]

            # Fused h -> all-gate matmul (single bf16 MXU pass per step).
            gh = jnp.dot(h.astype(bf16), whh, preferred_element_type=f32)
            rz = jax.nn.sigmoid(gi_rz + prev * wp_rz + gh[:, :H2])
            r = rz[:, :H]
            z = rz[:, H:H2]
            n = jnp.tanh(gi_n + prev * wp_n + r * (gh[:, H2:H3] + bhn))
            h_new = (1.0 - z) * n + z * h

            # module_02: Linear -> ReLU, then two VPU dot products (mul + sum)
            # instead of a 2-column MXU matmul on the serial critical path.
            y1 = jax.nn.relu(jnp.dot(h_new.astype(bf16), wm1,
                                     preferred_element_type=f32) + bm1)
            m = jnp.sum(y1 * wm2m, axis=-1, keepdims=True) + bm2m    # (BT, 1)
            s = jnp.sum(y1 * wm2s, axis=-1, keepdims=True) + bm2s    # (BT, 1)
            sample = m + jnp.exp(s) * nz

            # Lane-masked merge into fixed-width (BT, 128) accumulators (cost
            # independent of TC).
            msk = lane == k
            m_acc = jnp.where(msk, m, m_acc)
            s_acc = jnp.where(msk, s, s_acc)
            p_acc = jnp.where(msk, sample, p_acc)
            return h_new, sample, m_acc, s_acc, p_acc

        # TODO(synk): unroll in {2, 4, 8} should be swept on hardware.
        h, prev, m_acc, s_acc, p_acc = jax.lax.fori_loop(
            0, TG, step, (h_scr[...], prev_scr[...], acc0, acc0, acc0),
            unroll=4)

        # One full-tile, lane-dense store per output per 128 steps.
        m_ref[sub] = m_acc
        s_ref[sub] = s_acc
        p_ref[sub] = p_acc
        h_scr[...] = h
        prev_scr[...] = prev


# --------------------------------- wrapper -----------------------------------
def scyclone_wavernn_forward(x, params, noise, num_batch_shards=1):
    B, S, NB, NF = x.shape
    F = NB * NF
    H = params["w_hh"].shape[0]               # ch_base
    T = S * NB
    H3 = 3 * H

    def rup(a, m):
        return ((a + m - 1) // m) * m

    f32 = jnp.float32
    bf16 = jnp.bfloat16

    # ---- tiling --------------------------------------------------------------
    Bp = rup(B, 8 * num_batch_shards)         # pad batch to full sublanes/shard
    BT = Bp // num_batch_shards               # batch rows per (v7x) core shard
    rows = B * S
    TM = min(512, rup(rows, 8))               # MLP row tile
    rows_pad = rup(rows, TM)
    TG = 128                                  # sub-block / accumulator width
    T_pad = rup(T, TG)
    n_grp = T_pad // TG
    cpd = 1                                   # largest multiple-of-128 chunk
    for d in range(min(8, n_grp), 0, -1):     # (<=1024 steps) dividing T_pad
        if n_grp % d == 0:
            cpd = d
            break
    TC = cpd * TG
    n_chunks = T_pad // TC
    P = rup(H3 + 1, 128)                      # packed slab: [r|z|n|noise|pad]

    def gate(w, g):
        return w[:, g * H:(g + 1) * H]

    # ---- stage 1: module_01 MLP fused with hoisted x->gate projection --------
    x_flat = jnp.pad(x.reshape(rows, F).astype(f32),
                     ((0, rows_pad - rows), (0, 0)))

    w_ihx, b_ih, b_hh = params["w_ihx"], params["b_ih"], params["b_hh"]
    # TODO(synk): on v5e, if MXU-bound, replace the kron (75% structural zeros)
    # with an NB-iteration loop of dense per-slot matmuls.
    wxg = jnp.kron(jnp.eye(NB, dtype=f32), w_ihx).astype(bf16)
    bias_slot = jnp.concatenate(
        [gate(b_ih, 0) + gate(b_hh, 0),        # b_ir + b_hr folded
         gate(b_ih, 1) + gate(b_hh, 1),        # b_iz + b_hz folded
         gate(b_ih, 2)], axis=1)               # b_in only (b_hn stays in r*(.))
    bxg = jnp.tile(bias_slot, (1, NB))

    mlp_weights = [params["w1"].astype(bf16), params["b1"],
                   params["w2"].astype(bf16), params["b2"],
                   params["w3"].astype(bf16), params["b3"],
                   params["w4"].astype(bf16), params["b4"],
                   wxg, bxg]

    def mlp_const_spec(arr):
        zeros = (0,) * arr.ndim
        return pl.BlockSpec(arr.shape, lambda i: zeros)

    mlp_in_specs = ([pl.BlockSpec((TM, F), lambda i: (i, 0))] +
                    [mlp_const_spec(w) for w in mlp_weights])

    gi_flat = pl.pallas_call(
        mlp_proj_kernel,
        out_shape=jax.ShapeDtypeStruct((rows_pad, NB * H3), bf16),
        grid_spec=pltpu.PrefetchScalarGridSpec(
            num_scalar_prefetch=0,
            grid=(rows_pad // TM,),
            in_specs=mlp_in_specs,
            out_specs=pl.BlockSpec((TM, NB * H3), lambda i: (i, 0)),
        ),
        compiler_params=pltpu.CompilerParams(
            dimension_semantics=("parallel",)),
    )(x_flat, *mlp_weights)

    # ---- stage 1.5 (XLA, off the serial path): lane-packed time-major slab ---
    gi = gi_flat[:rows].reshape(B, T, H3)          # t = s*NB + slot
    gi = jnp.transpose(gi, (1, 0, 2))              # (T, B, 3H) bf16
    gi = jnp.pad(gi, ((0, T_pad - T), (0, Bp - B), (0, 0)))
    nz = jnp.pad(noise.astype(bf16), ((0, T_pad - T), (0, Bp - B)))[..., None]
    pieces = [gi, nz]
    if P > H3 + 1:
        pieces.append(jnp.zeros((T_pad, Bp, P - H3 - 1), bf16))
    slab = jnp.concatenate(pieces, axis=-1)        # (T_pad, Bp, P) bf16

    # ---- stage 2: chunked serial GRU recurrence + module_02 ------------------
    whh_bf = params["w_hh"].astype(bf16)           # (H, 3H) fused gate weight
    bhn = gate(b_hh, 2)                            # (1, H)
    wm1_bf = params["wm1"].astype(bf16)
    bm1 = params["bm1"]
    wm2m = params["wm2"][:, 0].reshape(1, H)
    wm2s = params["wm2"][:, 1].reshape(1, H)
    bm2m = params["bm2"][:, 0].reshape(1, 1)
    bm2s = params["bm2"][:, 1].reshape(1, 1)

    gru_consts = [whh_bf, bhn, params["w_ihp"], wm1_bf, bm1,
                  wm2m, wm2s, bm2m, bm2s]

    def const_spec(arr):
        zeros = (0,) * arr.ndim
        return pl.BlockSpec(arr.shape, lambda b, c: zeros)

    gru_in_specs = ([pl.BlockSpec((TC, BT, P), lambda b, c: (c, b, 0))] +
                    [const_spec(w) for w in gru_consts])

    # Outputs are time-major (n_grp, Bp, 128) slabs: every sub-block write is a
    # full (BT, 128) unmasked tile store at a leading-axis index.
    out_sds = jax.ShapeDtypeStruct((n_grp, Bp, TG), f32)
    m_out, s_out, p_out = pl.pallas_call(
        gru_chunk_kernel,
        out_shape=(out_sds, out_sds, out_sds),
        grid_spec=pltpu.PrefetchScalarGridSpec(
            num_scalar_prefetch=0,
            grid=(num_batch_shards, n_chunks),
            in_specs=gru_in_specs,
            out_specs=[pl.BlockSpec((cpd, BT, TG), lambda b, c: (c, b, 0))] * 3,
            scratch_shapes=[pltpu.VMEM((BT, H), f32),    # hidden state h
                            pltpu.VMEM((BT, 1), f32)],   # prev_sample
        ),
        compiler_params=pltpu.CompilerParams(
            dimension_semantics=("parallel", "arbitrary"),
            # ~9 MiB actually used at TC=1024; cap fits v5e/v6e/v7x scoped VMEM.
            vmem_limit_bytes=32 * 1024 * 1024),
    )(slab, *gru_consts)

    def unslab(o):                                  # (n_grp, Bp, TG) -> (Bp, T)
        return jnp.transpose(o, (1, 0, 2)).reshape(Bp, T_pad)

    m_full, s_full, p_full = unslab(m_out), unslab(s_out), unslab(p_out)

    # PyTorch output shapes: m, s -> (batch, T); samples -> (1, T*batch).
    m_final = m_full[:B, :T]
    s_final = s_full[:B, :T]
    samples_final = p_full[:B, :T].T.reshape(1, T * B)
    return m_final, s_final, samples_final


# ---------------------------- pure-JAX reference -----------------------------
def reference_forward(x, params, noise):
    B, S, NB, NF = x.shape
    F = NB * NF
    H = params["w_hh"].shape[0]
    CH = params["w_ihx"].shape[0]
    T = S * NB

    xf = x.reshape(B, S, F).astype(jnp.float32)
    h1 = jax.nn.relu(xf @ params["w1"] + params["b1"])
    h2 = jax.nn.relu(h1 @ params["w2"] + params["b2"])
    h3 = jax.nn.relu(h2 @ params["w3"] + params["b3"])
    feat = jax.nn.relu(h3 @ params["w4"] + params["b4"])

    xs = feat.reshape(B, T, CH).transpose(1, 0, 2)
    h = jnp.zeros((B, H), jnp.float32)
    prev = jnp.zeros((B, 1), jnp.float32)
    ms, ss, ps = [], [], []
    for t in range(T):
        xt = xs[t]
        gi = xt @ params["w_ihx"] + prev * params["w_ihp"] + params["b_ih"]
        gh = h @ params["w_hh"] + params["b_hh"]
        r = jax.nn.sigmoid(gi[:, :H] + gh[:, :H])
        z = jax.nn.sigmoid(gi[:, H:2 * H] + gh[:, H:2 * H])
        n = jnp.tanh(gi[:, 2 * H:] + r * gh[:, 2 * H:])
        h = (1.0 - z) * n + z * h
        y = jax.nn.relu(h @ params["wm1"] + params["bm1"])
        y = y @ params["wm2"] + params["bm2"]
        m = y[:, 0:1]
        s = y[:, 1:2]
        prev = m + jnp.exp(s) * noise[t].reshape(B, 1)
        ms.append(m)
        ss.append(s)
        ps.append(prev)
    m_final = jnp.stack([m[:, 0] for m in ms], axis=0).T        # (B, T)
    s_final = jnp.stack([s[:, 0] for s in ss], axis=0).T        # (B, T)
    samples_final = jnp.concatenate(ps, axis=0).T               # (1, T*B)
    return m_final, s_final, samples_final


# ----------------------------------- main ------------------------------------
if __name__ == "__main__":
    # Small, self-consistent config (ch_hidden == ch_base*8 / n_bins so the
    # module's reshape is valid).
    batch, seq_len = 2, 2
    n_bins, n_frames = 4, 4
    ch_base = 32
    ch_hidden = ch_base * 8 // n_bins        # 64
    feat_in = n_bins * n_frames              # 16
    T = seq_len * n_bins                     # 8

    key = jax.random.PRNGKey(0)
    ks = jax.random.split(key, 20)

    def init(k, shape, scale=0.1):
        return scale * jax.random.normal(k, shape, dtype=jnp.float32)

    params = {
        # module_01
        "w1": init(ks[0], (feat_in, ch_base)),         "b1": init(ks[1], (1, ch_base)),
        "w2": init(ks[2], (ch_base, ch_base * 2)),     "b2": init(ks[3], (1, ch_base * 2)),
        "w3": init(ks[4], (ch_base * 2, ch_base * 4)), "b3": init(ks[5], (1, ch_base * 4)),
        "w4": init(ks[6], (ch_base * 4, ch_base * 8)), "b4": init(ks[7], (1, ch_base * 8)),
        # GRUCell(ch_hidden + 1, ch_base); gate order [r, z, n]
        "w_ihx": init(ks[8], (ch_hidden, 3 * ch_base)),
        "w_ihp": init(ks[9], (1, 3 * ch_base)),
        "b_ih": init(ks[10], (1, 3 * ch_base)),
        "w_hh": init(ks[11], (ch_base, 3 * ch_base)),
        "b_hh": init(ks[12], (1, 3 * ch_base)),
        # module_02
        "wm1": init(ks[13], (ch_base, ch_base)),       "bm1": init(ks[14], (1, ch_base)),
        "wm2": init(ks[15], (ch_base, 2)),             "bm2": init(ks[16], (1, 2)),
    }

    x = jax.random.normal(ks[17], (batch, seq_len, n_bins, n_frames),
                          dtype=jnp.float32)
    # TODO(synk): torch.randn(batch) per step is replaced by this deterministic
    # pre-generated noise input (one value per step per batch row).
    noise = jax.random.normal(ks[18], (T, batch), dtype=jnp.float32)

    m_out, s_out, samp_out = scyclone_wavernn_forward(x, params, noise)
    jax.block_until_ready((m_out, s_out, samp_out))

    m_ref, s_ref, samp_ref = reference_forward(x, params, noise)
    np.testing.assert_allclose(np.asarray(m_out), np.asarray(m_ref),
                               rtol=1e-2, atol=1e-2)
    np.testing.assert_allclose(np.asarray(s_out), np.asarray(s_ref),
                               rtol=1e-2, atol=1e-2)
    np.testing.assert_allclose(np.asarray(samp_out), np.asarray(samp_ref),
                               rtol=1e-2, atol=1e-2)

    assert m_out.shape == (batch, T)
    assert s_out.shape == (batch, T)
    assert samp_out.shape == (1, T * batch)

    print("KERNEL_OK")
</pallas_src>

<mosaic_0001>
module attributes {stable_mosaic.version = 11 : i64} {
  func.func @mlp_proj_kernel(%arg0: i32, %arg1: memref<8x16xf32, #tpu.memory_space<vmem>>, %arg2: memref<16x32xbf16, #tpu.memory_space<vmem>>, %arg3: memref<1x32xf32, #tpu.memory_space<vmem>>, %arg4: memref<32x64xbf16, #tpu.memory_space<vmem>>, %arg5: memref<1x64xf32, #tpu.memory_space<vmem>>, %arg6: memref<64x128xbf16, #tpu.memory_space<vmem>>, %arg7: memref<1x128xf32, #tpu.memory_space<vmem>>, %arg8: memref<128x256xbf16, #tpu.memory_space<vmem>>, %arg9: memref<1x256xf32, #tpu.memory_space<vmem>>, %arg10: memref<256x384xbf16, #tpu.memory_space<vmem>>, %arg11: memref<1x384xf32, #tpu.memory_space<vmem>>, %arg12: memref<8x384xbf16, #tpu.memory_space<vmem>>) attributes {dimension_semantics = [#tpu.dimension_semantics<parallel>], iteration_bounds = array<i64: 1>, scalar_prefetch = 0 : i64, scratch_operands = 0 : i64, tpu.core_type = #tpu.core_type<tc>, window_params = [{transform_indices = @transform_0, window_bounds = array<i64: 8, 16>}, {pipeline_mode = #tpu.pipeline_mode<synchronous>, transform_indices = @transform_1, window_bounds = array<i64: 16, 32>}, {pipeline_mode = #tpu.pipeline_mode<synchronous>, transform_indices = @transform_2, window_bounds = array<i64: 1, 32>}, {pipeline_mode = #tpu.pipeline_mode<synchronous>, transform_indices = @transform_3, window_bounds = array<i64: 32, 64>}, {pipeline_mode = #tpu.pipeline_mode<synchronous>, transform_indices = @transform_4, window_bounds = array<i64: 1, 64>}, {pipeline_mode = #tpu.pipeline_mode<synchronous>, transform_indices = @transform_5, window_bounds = array<i64: 64, 128>}, {pipeline_mode = #tpu.pipeline_mode<synchronous>, transform_indices = @transform_6, window_bounds = array<i64: 1, 128>}, {pipeline_mode = #tpu.pipeline_mode<synchronous>, transform_indices = @transform_7, window_bounds = array<i64: 128, 256>}, {pipeline_mode = #tpu.pipeline_mode<synchronous>, transform_indices = @transform_8, window_bounds = array<i64: 1, 256>}, {pipeline_mode = #tpu.pipeline_mode<synchronous>, transform_indices = @transform_9, window_bounds = array<i64: 256, 384>}, {pipeline_mode = #tpu.pipeline_mode<synchronous>, transform_indices = @transform_10, window_bounds = array<i64: 1, 384>}, {transform_indices = @transform_11, window_bounds = array<i64: 8, 384>}]} {
    %c0 = arith.constant 0 : index
    %c0_0 = arith.constant 0 : index
    %0 = vector.load %arg1[%c0, %c0_0] : memref<8x16xf32, #tpu.memory_space<vmem>>, vector<8x16xf32>
    %1 = arith.truncf %0 : vector<8x16xf32> to vector<8x16xbf16>
    %c0_1 = arith.constant 0 : index
    %c0_2 = arith.constant 0 : index
    %2 = vector.load %arg2[%c0_1, %c0_2] : memref<16x32xbf16, #tpu.memory_space<vmem>>, vector<16x32xbf16>
    %cst = arith.constant dense<0.000000e+00> : vector<8x32xf32>
    %3 = tpu.matmul %1, %2, %cst {dimension_numbers = #tpu.dot_dimension_numbers<[1], [0], [0], [1], [0, 0, 1, 1], [], []>} : vector<8x16xbf16>, vector<16x32xbf16>, vector<8x32xf32> -> vector<8x32xf32>
    %c0_3 = arith.constant 0 : index
    %c0_4 = arith.constant 0 : index
    %4 = vector.load %arg3[%c0_3, %c0_4] : memref<1x32xf32, #tpu.memory_space<vmem>>, vector<1x32xf32>
    %5 = vector.broadcast %4 : vector<1x32xf32> to vector<8x32xf32>
    %6 = arith.addf %3, %5 : vector<8x32xf32>
    %cst_5 = arith.constant 0.000000e+00 : f32
    %7 = vector.broadcast %cst_5 : f32 to vector<8x32xf32>
    %8 = arith.maximumf %6, %7 : vector<8x32xf32>
    %9 = arith.truncf %8 : vector<8x32xf32> to vector<8x32xbf16>
    %c0_6 = arith.constant 0 : index
    %c0_7 = arith.constant 0 : index
    %10 = vector.load %arg4[%c0_6, %c0_7] : memref<32x64xbf16, #tpu.memory_space<vmem>>, vector<32x64xbf16>
    %cst_8 = arith.constant dense<0.000000e+00> : vector<8x64xf32>
    %11 = tpu.matmul %9, %10, %cst_8 {dimension_numbers = #tpu.dot_dimension_numbers<[1], [0], [0], [1], [0, 0, 1, 1], [], []>} : vector<8x32xbf16>, vector<32x64xbf16>, vector<8x64xf32> -> vector<8x64xf32>
    %c0_9 = arith.constant 0 : index
    %c0_10 = arith.constant 0 : index
    %12 = vector.load %arg5[%c0_9, %c0_10] : memref<1x64xf32, #tpu.memory_space<vmem>>, vector<1x64xf32>
    %13 = vector.broadcast %12 : vector<1x64xf32> to vector<8x64xf32>
    %14 = arith.addf %11, %13 : vector<8x64xf32>
    %cst_11 = arith.constant 0.000000e+00 : f32
    %15 = vector.broadcast %cst_11 : f32 to vector<8x64xf32>
    %16 = arith.maximumf %14, %15 : vector<8x64xf32>
    %17 = arith.truncf %16 : vector<8x64xf32> to vector<8x64xbf16>
    %c0_12 = arith.constant 0 : index
    %c0_13 = arith.constant 0 : index
    %18 = vector.load %arg6[%c0_12, %c0_13] : memref<64x128xbf16, #tpu.memory_space<vmem>>, vector<64x128xbf16>
    %cst_14 = arith.constant dense<0.000000e+00> : vector<8x128xf32>
    %19 = tpu.matmul %17, %18, %cst_14 {dimension_numbers = #tpu.dot_dimension_numbers<[1], [0], [0], [1], [0, 0, 1, 1], [], []>} : vector<8x64xbf16>, vector<64x128xbf16>, vector<8x128xf32> -> vector<8x128xf32>
    %c0_15 = arith.constant 0 : index
    %c0_16 = arith.constant 0 : index
    %20 = vector.load %arg7[%c0_15, %c0_16] : memref<1x128xf32, #tpu.memory_space<vmem>>, vector<1x128xf32>
    %21 = vector.broadcast %20 : vector<1x128xf32> to vector<8x128xf32>
    %22 = arith.addf %19, %21 : vector<8x128xf32>
    %cst_17 = arith.constant 0.000000e+00 : f32
    %23 = vector.broadcast %cst_17 : f32 to vector<8x128xf32>
    %24 = arith.maximumf %22, %23 : vector<8x128xf32>
    %25 = arith.truncf %24 : vector<8x128xf32> to vector<8x128xbf16>
    %c0_18 = arith.constant 0 : index
    %c0_19 = arith.constant 0 : index
    %26 = vector.load %arg8[%c0_18, %c0_19] : memref<128x256xbf16, #tpu.memory_space<vmem>>, vector<128x256xbf16>
    %cst_20 = arith.constant dense<0.000000e+00> : vector<8x256xf32>
    %27 = tpu.matmul %25, %26, %cst_20 {dimension_numbers = #tpu.dot_dimension_numbers<[1], [0], [0], [1], [0, 0, 1, 1], [], []>} : vector<8x128xbf16>, vector<128x256xbf16>, vector<8x256xf32> -> vector<8x256xf32>
    %c0_21 = arith.constant 0 : index
    %c0_22 = arith.constant 0 : index
    %28 = vector.load %arg9[%c0_21, %c0_22] : memref<1x256xf32, #tpu.memory_space<vmem>>, vector<1x256xf32>
    %29 = vector.broadcast %28 : vector<1x256xf32> to vector<8x256xf32>
    %30 = arith.addf %27, %29 : vector<8x256xf32>
    %cst_23 = arith.constant 0.000000e+00 : f32
    %31 = vector.broadcast %cst_23 : f32 to vector<8x256xf32>
    %32 = arith.maximumf %30, %31 : vector<8x256xf32>
    %33 = arith.truncf %32 : vector<8x256xf32> to vector<8x256xbf16>
    %c0_24 = arith.constant 0 : index
    %c0_25 = arith.constant 0 : index
    %34 = vector.load %arg10[%c0_24, %c0_25] : memref<256x384xbf16, #tpu.memory_space<vmem>>, vector<256x384xbf16>
    %cst_26 = arith.constant dense<0.000000e+00> : vector<8x384xf32>
    %35 = tpu.matmul %33, %34, %cst_26 {dimension_numbers = #tpu.dot_dimension_numbers<[1], [0], [0], [1], [0, 0, 1, 1], [], []>} : vector<8x256xbf16>, vector<256x384xbf16>, vector<8x384xf32> -> vector<8x384xf32>
    %c0_27 = arith.constant 0 : index
    %c0_28 = arith.constant 0 : index
    %36 = vector.load %arg11[%c0_27, %c0_28] : memref<1x384xf32, #tpu.memory_space<vmem>>, vector<1x384xf32>
    %37 = vector.broadcast %36 : vector<1x384xf32> to vector<8x384xf32>
    %38 = arith.addf %35, %37 : vector<8x384xf32>
    %39 = arith.truncf %38 : vector<8x384xf32> to vector<8x384xbf16>
    %c0_29 = arith.constant 0 : index
    %c0_30 = arith.constant 0 : index
    %40 = vector.load %arg12[%c0_29, %c0_30] : memref<8x384xbf16, #tpu.memory_space<vmem>>, vector<8x384xbf16>
    tpu.vector_store %arg12[%c0_29, %c0_30], %39 {strides = array<i32>} : memref<8x384xbf16, #tpu.memory_space<vmem>>, vector<8x384xbf16>,
    return
  }
  func.func @transform_0(%arg0: i32) -> (i32, i32) {
    %c0_i32 = arith.constant 0 : i32
    %c0_i32_0 = arith.constant 0 : i32
    return %arg0, %c0_i32 : i32, i32
  }
  func.func @transform_1(%arg0: i32) -> (i32, i32) {
    %c0_i32 = arith.constant 0 : i32
    %c0_i32_0 = arith.constant 0 : i32
    %c0_i32_1 = arith.constant 0 : i32
    return %c0_i32, %c0_i32_0 : i32, i32
  }
  func.func @transform_2(%arg0: i32) -> (i32, i32) {
    %c0_i32 = arith.constant 0 : i32
    %c0_i32_0 = arith.constant 0 : i32
    %c0_i32_1 = arith.constant 0 : i32
    return %c0_i32, %c0_i32_0 : i32, i32
  }
  func.func @transform_3(%arg0: i32) -> (i32, i32) {
    %c0_i32 = arith.constant 0 : i32
    %c0_i32_0 = arith.constant 0 : i32
    %c0_i32_1 = arith.constant 0 : i32
    return %c0_i32, %c0_i32_0 : i32, i32
  }
  func.func @transform_4(%arg0: i32) -> (i32, i32) {
    %c0_i32 = arith.constant 0 : i32
    %c0_i32_0 = arith.constant 0 : i32
    %c0_i32_1 = arith.constant 0 : i32
    return %c0_i32, %c0_i32_0 : i32, i32
  }
  func.func @transform_5(%arg0: i32) -> (i32, i32) {
    %c0_i32 = arith.constant 0 : i32
    %c0_i32_0 = arith.constant 0 : i32
    %c0_i32_1 = arith.constant 0 : i32
    return %c0_i32, %c0_i32_0 : i32, i32
  }
  func.func @transform_6(%arg0: i32) -> (i32, i32) {
    %c0_i32 = arith.constant 0 : i32
    %c0_i32_0 = arith.constant 0 : i32
    %c0_i32_1 = arith.constant 0 : i32
    return %c0_i32, %c0_i32_0 : i32, i32
  }
  func.func @transform_7(%arg0: i32) -> (i32, i32) {
    %c0_i32 = arith.constant 0 : i32
    %c0_i32_0 = arith.constant 0 : i32
    %c0_i32_1 = arith.constant 0 : i32
    return %c0_i32, %c0_i32_0 : i32, i32
  }
  func.func @transform_8(%arg0: i32) -> (i32, i32) {
    %c0_i32 = arith.constant 0 : i32
    %c0_i32_0 = arith.constant 0 : i32
    %c0_i32_1 = arith.constant 0 : i32
    return %c0_i32, %c0_i32_0 : i32, i32
  }
  func.func @transform_9(%arg0: i32) -> (i32, i32) {
    %c0_i32 = arith.constant 0 : i32
    %c0_i32_0 = arith.constant 0 : i32
    %c0_i32_1 = arith.constant 0 : i32
    return %c0_i32, %c0_i32_0 : i32, i32
  }
  func.func @transform_10(%arg0: i32) -> (i32, i32) {
    %c0_i32 = arith.constant 0 : i32
    %c0_i32_0 = arith.constant 0 : i32
    %c0_i32_1 = arith.constant 0 : i32
    return %c0_i32, %c0_i32_0 : i32, i32
  }
  func.func @transform_11(%arg0: i32) -> (i32, i32) {
    %c0_i32 = arith.constant 0 : i32
    %c0_i32_0 = arith.constant 0 : i32
    return %arg0, %c0_i32 : i32, i32
  }
}

</mosaic_0001>

<llo_original>
// kernel: tpu_custom_call.1
$region0: #{tpu_custom_call.1}
  #allocation0 [shape = 'u32[]', space=smem, size = 0x4, offset = 0x4, fixed_abs, tag = 'smem constant byte address 0x4 - core index']
  #allocation1 [shape = 'u32[144,128]{1,0:T(1,128)}', space=vmem, size = 0x12000, scoped, tag = 'internal scratch']
  %s0 = inlined_call_operand.hbm [shape: f32[8,16], index: 0, kind: input, shape index: {}]
  %s1 = inlined_call_operand.hbm [shape: bf16[16,32], index: 1, kind: input, shape index: {}]
  %s2 = inlined_call_operand.vmem [shape: f32[1,32], index: 2, kind: input, shape index: {}]
  %s3 = inlined_call_operand.hbm [shape: bf16[32,64], index: 3, kind: input, shape index: {}]
  %s4 = inlined_call_operand.vmem [shape: f32[1,64], index: 4, kind: input, shape index: {}]
  %s5 = inlined_call_operand.hbm [shape: bf16[64,128], index: 5, kind: input, shape index: {}]
  %s6 = inlined_call_operand.vmem [shape: f32[1,128], index: 6, kind: input, shape index: {}]
  %s7 = inlined_call_operand.hbm [shape: bf16[128,256], index: 7, kind: input, shape index: {}]
  %s8 = inlined_call_operand.vmem [shape: f32[1,256], index: 8, kind: input, shape index: {}]
  %s9 = inlined_call_operand.hbm [shape: bf16[256,384], index: 9, kind: input, shape index: {}]
  %s10 = inlined_call_operand.vmem [shape: f32[1,384], index: 10, kind: input, shape index: {}]
  %s11 = inlined_call_operand.hbm [shape: bf16[8,384], index: 11, kind: output, shape index: {}]
  %s12 = sld [smem:[#allocation0]]
  $region78: #{tpu_custom_call.1} parent=0
    _
  %s14 = ssub.s32 1, %s12
  %s15 = scalar_select 0, %s14, %s12
  $region1: #{tpu_custom_call.1} parent=0
    #allocation2 [shape = 'u8[4096]{0}', space=vmem, size = 0x1000, scoped, tag = 'input window, operand 0, single buffered']
    #allocation3 [shape = 's32[1]{0}', space=sflag, size = 0x4, scoped, tag = 'scoped memory for tpu_custom_call.1']
    #allocation4 [shape = 's32[1]{0}', space=sflag, size = 0x4, scoped, tag = 'scoped memory for tpu_custom_call.1']
    #allocation5 [shape = 'u8[4096]{0}', space=vmem, size = 0x1000, scoped, tag = 'input window, operand 1, single buffered']
    #allocation6 [shape = 's32[1]{0}', space=sflag, size = 0x4, scoped, tag = 'scoped memory for tpu_custom_call.1']
    #allocation7 [shape = 'u8[8192]{0}', space=vmem, size = 0x2000, scoped, tag = 'input window, operand 3, single buffered']
    #allocation8 [shape = 'u8[16384]{0}', space=vmem, size = 0x4000, scoped, tag = 'input window, operand 5, single buffered']
    #allocation9 [shape = 's32[1]{0}', space=sflag, size = 0x4, scoped, tag = 'scoped memory for tpu_custom_call.1']
    #allocation10 [shape = 'u8[65536]{0}', space=vmem, size = 0x10000, scoped, tag = 'input window, operand 7, single buffered']
    #allocation11 [shape = 'u8[196608]{0}', space=vmem, size = 0x30000, scoped, tag = 'input window, operand 9, single buffered']
    #allocation12 [shape = 's32[1]{0}', space=sflag, size = 0x4, scoped, tag = 'scoped memory for tpu_custom_call.1']
    #allocation13 [shape = 'u8[6144]{0}', space=vmem, size = 0x1800, scoped, tag = 'output window, operand 0, single buffered']
    %16 = vsyncpa [#allocation3], 0
    %17 = vsyncpa [#allocation6], 0
    %18 = vsyncpa [#allocation9], 0
    %19 = vsyncpa [#allocation12], 0
    %20 = vsyncpa [#allocation4], 0
    // Predicated region
    $region2: #{tpu_custom_call.1} parent=1 // pred_check
      _
    $region3: #{tpu_custom_call.1} parent=1 // pred_check_branch
      %22 = sbr.rel (0) target = $region5
    $region4: #{tpu_custom_call.1} parent=1 // pred_region
      %s24 = ssub.s32 128, 128
      %25 = vsyncadd [#allocation3], %s24
      %s27 = sshll.u32 [#allocation2], 4
      %s28 = int_to_ptr.vmem [resolvable:$true] %s27
      %30 = dma.hbm_to_vmem [thread:$0]  %s0, 128, %s28, [#allocation3]
    $region5: #{tpu_custom_call.1} parent=1 // pred_fallthru
      _
    // Predicated region
    $region6: #{tpu_custom_call.1} parent=1 // pred_check
      _
    $region7: #{tpu_custom_call.1} parent=1 // pred_check_branch
      %32 = sbr.rel (0) target = $region9
    $region8: #{tpu_custom_call.1} parent=1 // pred_region
      %s34 = ssub.s32 128, 128
      %35 = vsyncadd [#allocation6], %s34
      %s36 = sshll.u32 [#allocation5], 4
      %s37 = int_to_ptr.vmem [resolvable:$true] %s36
      %42 = dma.hbm_to_vmem [thread:$0]  %s1, 128, %s37, [#allocation6], 64, 64, 4
    $region9: #{tpu_custom_call.1} parent=1 // pred_fallthru
      _
    // Predicated region
    $region10: #{tpu_custom_call.1} parent=1 // pred_check
      _
    $region11: #{tpu_custom_call.1} parent=1 // pred_check_branch
      %44 = sbr.rel (0) target = $region13
    $region12: #{tpu_custom_call.1} parent=1 // pred_region
      _
    $region13: #{tpu_custom_call.1} parent=1 // pred_fallthru
      _
    // Predicated region
    $region14: #{tpu_custom_call.1} parent=1 // pred_check
      _
    $region15: #{tpu_custom_call.1} parent=1 // pred_check_branch
      %46 = sbr.rel (0) target = $region17
    $region16: #{tpu_custom_call.1} parent=1 // pred_region
      %s48 = ssub.s32 256, 256
      %49 = vsyncadd [#allocation6], %s48
      %s50 = sshll.u32 [#allocation7], 4
      %s51 = int_to_ptr.vmem [resolvable:$true] %s50
      %56 = dma.hbm_to_vmem [thread:$0]  %s3, 256, %s51, [#allocation6], 64, 64, 4
    $region17: #{tpu_custom_call.1} parent=1 // pred_fallthru
      _
    // Predicated region
    $region18: #{tpu_custom_call.1} parent=1 // pred_check
      _
    $region19: #{tpu_custom_call.1} parent=1 // pred_check_branch
      %58 = sbr.rel (0) target = $region21
    $region20: #{tpu_custom_call.1} parent=1 // pred_region
      _
    $region21: #{tpu_custom_call.1} parent=1 // pred_fallthru
      _
    // Predicated region
    $region22: #{tpu_custom_call.1} parent=1 // pred_check
      _
    $region23: #{tpu_custom_call.1} parent=1 // pred_check_branch
      %60 = sbr.rel (0) target = $region25
    $region24: #{tpu_custom_call.1} parent=1 // pred_region
      %s62 = ssub.s32 512, 512
      %63 = vsyncadd [#allocation9], %s62
      %s64 = sshll.u32 [#allocation8], 4
      %s65 = int_to_ptr.vmem [resolvable:$true] %s64
      %70 = dma.hbm_to_vmem [thread:$0]  %s5, 512, %s65, [#allocation9], 64, 64, 4
    $region25: #{tpu_custom_call.1} parent=1 // pred_fallthru
      _
    // Predicated region
    $region26: #{tpu_custom_call.1} parent=1 // pred_check
      _
    $region27: #{tpu_custom_call.1} parent=1 // pred_check_branch
      %72 = sbr.rel (0) target = $region29
    $region28: #{tpu_custom_call.1} parent=1 // pred_region
      _
    $region29: #{tpu_custom_call.1} parent=1 // pred_fallthru
      _
    // Predicated region
    $region30: #{tpu_custom_call.1} parent=1 // pred_check
      _
    $region31: #{tpu_custom_call.1} parent=1 // pred_check_branch
      %74 = sbr.rel (0) target = $region33
    $region32: #{tpu_custom_call.1} parent=1 // pred_region
      %s76 = ssub.s32 2048, 2048
      %77 = vsyncadd [#allocation9], %s76
      %s78 = sshll.u32 [#allocation10], 4
      %s79 = int_to_ptr.vmem [resolvable:$true] %s78
      %84 = dma.hbm_to_vmem [thread:$0]  %s7, 2048, %s79, [#allocation9], 128, 128, 8
    $region33: #{tpu_custom_call.1} parent=1 // pred_fallthru
      _
    // Predicated region
    $region34: #{tpu_custom_call.1} parent=1 // pred_check
      _
    $region35: #{tpu_custom_call.1} parent=1 // pred_check_branch
      %86 = sbr.rel (0) target = $region37
    $region36: #{tpu_custom_call.1} parent=1 // pred_region
      _
    $region37: #{tpu_custom_call.1} parent=1 // pred_fallthru
      _
    // Predicated region
    $region38: #{tpu_custom_call.1} parent=1 // pred_check
      _
    $region39: #{tpu_custom_call.1} parent=1 // pred_check_branch
      %88 = sbr.rel (0) target = $region41
    $region40: #{tpu_custom_call.1} parent=1 // pred_region
      %s90 = ssub.s32 6144, 6144
      %91 = vsyncadd [#allocation12], %s90
      %s92 = sshll.u32 [#allocation11], 4
      %s93 = int_to_ptr.vmem [resolvable:$true] %s92
      %98 = dma.hbm_to_vmem [thread:$0]  %s9, 6144, %s93, [#allocation12], 192, 192, 12
    $region41: #{tpu_custom_call.1} parent=1 // pred_fallthru
      _
    // Predicated region
    $region42: #{tpu_custom_call.1} parent=1 // pred_check
      _
    $region43: #{tpu_custom_call.1} parent=1 // pred_check_branch
      %100 = sbr.rel (0) target = $region45
    $region44: #{tpu_custom_call.1} parent=1 // pred_region
      _
    $region45: #{tpu_custom_call.1} parent=1 // pred_fallthru
      _
    // Predicated region
    $region46: #{tpu_custom_call.1} parent=1 // pred_check
      _
    $region47: #{tpu_custom_call.1} parent=1 // pred_check_branch
      %102 = sbr.rel (0) target = $region49
    $region48: #{tpu_custom_call.1} parent=1 // pred_region
      %103 = dma.done [#allocation3], 128
    $region49: #{tpu_custom_call.1} parent=1 // pred_fallthru
      _
    // Predicated region
    $region50: #{tpu_custom_call.1} parent=1 // pred_check
      _
    $region51: #{tpu_custom_call.1} parent=1 // pred_check_branch
      %105 = sbr.rel (0) target = $region53
    $region52: #{tpu_custom_call.1} parent=1 // pred_region
      %106 = dma.done [#allocation6], 128
    $region53: #{tpu_custom_call.1} parent=1 // pred_fallthru
      _
    // Predicated region
    $region54: #{tpu_custom_call.1} parent=1 // pred_check
      _
    $region55: #{tpu_custom_call.1} parent=1 // pred_check_branch
      %108 = sbr.rel (0) target = $region57
    $region56: #{tpu_custom_call.1} parent=1 // pred_region
      %109 = dma.done [#allocation6], 256
    $region57: #{tpu_custom_call.1} parent=1 // pred_fallthru
      _
    // Predicated region
    $region58: #{tpu_custom_call.1} parent=1 // pred_check
      _
    $region59: #{tpu_custom_call.1} parent=1 // pred_check_branch
      %111 = sbr.rel (0) target = $region61
    $region60: #{tpu_custom_call.1} parent=1 // pred_region
      %112 = dma.done [#allocation9], 512
    $region61: #{tpu_custom_call.1} parent=1 // pred_fallthru
      _
    // Predicated region
    $region62: #{tpu_custom_call.1} parent=1 // pred_check
      _
    $region63: #{tpu_custom_call.1} parent=1 // pred_check_branch
      %114 = sbr.rel (0) target = $region65
    $region64: #{tpu_custom_call.1} parent=1 // pred_region
      %115 = dma.done [#allocation9], 2048
    $region65: #{tpu_custom_call.1} parent=1 // pred_fallthru
      _
    // Predicated region
    $region66: #{tpu_custom_call.1} parent=1 // pred_check
      _
    $region67: #{tpu_custom_call.1} parent=1 // pred_check_branch
      %117 = sbr.rel (0) target = $region69
    $region68: #{tpu_custom_call.1} parent=1 // pred_region
      %118 = dma.done [#allocation12], 6144
    $region69: #{tpu_custom_call.1} parent=1 // pred_fallthru
      _
    %v120 = vld [vmem:[#allocation2] sm:$0xff]
    %v121 = vpack.c.bf16 %v120, %v120
    %v122 = vld [vmem:[#allocation5] sm:$0xf]
    %v123 = vld [vmem:[#allocation5 + $0x4] sm:$0xf]
    %v124 = vld [vmem:[%s2] sm:$0x1]
    %v126 = vlaneseq
    %v127 = vshrl.u32 %v126, 7
    %v128 = vsub.s32 0, %v127
    %v129 = vrot.slane %v124, %v128
    %v133 = vunpack.c.l.b16 %v122
    %v134 = vunpack.c.l.b16 %v123
    %v135 = vpack.c.b16 %v134, %v133
    %vm137 = vcmask 130048
    %v139 = vsel %vm137, %v121, 0
    %141 = vmatprep.subr.bf16.mxu0 0
    %142 = vmatpush1.bf16.msra.mxu0 %v135
    %143 = vmatprep.subr.bf16.mxu0 0
    %144 = vmatpush1.bf16.msra.mxu0 0
    %145 = vmatprep.subr.bf16.mxu0 0
    %146 = vmatpush1.bf16.msra.mxu0 0
    %147 = vmatprep.subr.bf16.mxu0 0
    %148 = vmatpush1.bf16.msra.mxu0 0
    %149 = vmatprep.subr.bf16.mxu0 0
    %150 = vmatpush1.bf16.msra.mxu0 0
    %151 = vmatprep.subr.bf16.mxu0 0
    %152 = vmatpush1.bf16.msra.mxu0 0
    %153 = vmatprep.subr.bf16.mxu0 0
    %154 = vmatpush1.bf16.msra.mxu0 0
    %155 = vmatprep.subr.bf16.mxu0 0
    %156 = vmatpush1.bf16.msra.mxu0 0
    %157 = vmatprep.subr.bf16.mxu0 0
    %158 = vmatpush1.bf16.msra.mxu0 0
    %159 = vmatprep.subr.bf16.mxu0 0
    %160 = vmatpush1.bf16.msra.mxu0 0
    %161 = vmatprep.subr.bf16.mxu0 0
    %162 = vmatpush1.bf16.msra.mxu0 0
    %163 = vmatprep.subr.bf16.mxu0 0
    %164 = vmatpush1.bf16.msra.mxu0 0
    %165 = vmatprep.subr.bf16.mxu0 0
    %166 = vmatpush1.bf16.msra.mxu0 0
    %167 = vmatprep.subr.bf16.mxu0 0
    %168 = vmatpush1.bf16.msra.mxu0 0
    %169 = vmatprep.subr.bf16.mxu0 0
    %170 = vmatpush1.bf16.msra.mxu0 0
    %171 = vmatprep.subr.bf16.mxu0 0
    %172 = vmatpush1.bf16.msra.mxu0 0
    %173 = vmatprep.mubr.bf16.mxu0 0
    %174 = vmatmul.mubr.bf16.gmra.mrb[0].mxu0 %v139
    %v175 = vpop.f32.mrb[0].mxu0
    %v176 = vadd.f32 %v129, %v175
    %v177 = vpop.f32.mrb[0].mxu0
    %v178 = vpop.f32.mrb[0].mxu0
    %v179 = vpop.f32.mrb[0].mxu0
    %180 = vdwg.mxu0
    %v181 = vmax.f32 %v176, 0.0
    %v182 = vpack.c.bf16 %v181, %v181
    %v183 = vld [vmem:[#allocation7] sm:$0xf]
    %v184 = vld [vmem:[#allocation7 + $0x4] sm:$0xf]
    %v185 = vld [vmem:[#allocation7 + $0x8] sm:$0xf]
    %v186 = vld [vmem:[#allocation7 + $0xc] sm:$0xf]
    %v187 = vld [vmem:[%s4] sm:$0x1]
    %v189 = vlaneseq
    %v190 = vshrl.u32 %v189, 7
    %v191 = vsub.s32 0, %v190
    %v192 = vrot.slane %v187, %v191
    %v198 = vunpack.c.l.b16 %v183
    %v199 = vunpack.c.l.b16 %v184
    %v200 = vunpack.c.l.b16 %v185
    %v201 = vunpack.c.l.b16 %v186
    %v202 = vpack.c.b16 %v199, %v198
    %v203 = vpack.c.b16 %v201, %v200
    %vm206 = vcmask 261120
    %v208 = vsel %vm206, %v182, 0
    %210 = vmatprep.subr.bf16.mxu0 0
    %211 = vmatpush1.bf16.msra.mxu0 %v202
    %212 = vmatprep.subr.bf16.mxu0 0
    %213 = vmatpush1.bf16.msra.mxu0 %v203
    %214 = vmatprep.subr.bf16.mxu0 0
    %215 = vmatpush1.bf16.msra.mxu0 0
    %216 = vmatprep.subr.bf16.mxu0 0
    %217 = vmatpush1.bf16.msra.mxu0 0
    %218 = vmatprep.subr.bf16.mxu0 0
    %219 = vmatpush1.bf16.msra.mxu0 0
    %220 = vmatprep.subr.bf16.mxu0 0
    %221 = vmatpush1.bf16.msra.mxu0 0
    %222 = vmatprep.subr.bf16.mxu0 0
    %223 = vmatpush1.bf16.msra.mxu0 0
    %224 = vmatprep.subr.bf16.mxu0 0
    %225 = vmatpush1.bf16.msra.mxu0 0
    %226 = vmatprep.subr.bf16.mxu0 0
    %227 = vmatpush1.bf16.msra.mxu0 0
    %228 = vmatprep.subr.bf16.mxu0 0
    %229 = vmatpush1.bf16.msra.mxu0 0
    %230 = vmatprep.subr.bf16.mxu0 0
    %231 = vmatpush1.bf16.msra.mxu0 0
    %232 = vmatprep.subr.bf16.mxu0 0
    %233 = vmatpush1.bf16.msra.mxu0 0
    %234 = vmatprep.subr.bf16.mxu0 0
    %235 = vmatpush1.bf16.msra.mxu0 0
    %236 = vmatprep.subr.bf16.mxu0 0
    %237 = vmatpush1.bf16.msra.mxu0 0
    %238 = vmatprep.subr.bf16.mxu0 0
    %239 = vmatpush1.bf16.msra.mxu0 0
    %240 = vmatprep.subr.bf16.mxu0 0
    %241 = vmatpush1.bf16.msra.mxu0 0
    %242 = vmatprep.mubr.bf16.mxu0 0
    %243 = vmatmul.mubr.bf16.gmra.mrb[0].mxu0 %v208
    %v244 = vpop.f32.mrb[0].mxu0
    %v245 = vadd.f32 %v192, %v244
    %v246 = vpop.f32.mrb[0].mxu0
    %v247 = vpop.f32.mrb[0].mxu0
    %v248 = vpop.f32.mrb[0].mxu0
    %249 = vdwg.mxu0
    %v250 = vmax.f32 %v245, 0.0
    %v251 = vpack.c.bf16 %v250, %v250
    %v252 = vld [vmem:[#allocation8] sm:$0xf]
    %v253 = vld [vmem:[#allocation8 + $0x4] sm:$0xf]
    %v254 = vld [vmem:[#allocation8 + $0x8] sm:$0xf]
    %v255 = vld [vmem:[#allocation8 + $0xc] sm:$0xf]
    %v256 = vld [vmem:[#allocation8 + $0x10] sm:$0xf]
    %v257 = vld [vmem:[#allocation8 + $0x14] sm:$0xf]
    %v258 = vld [vmem:[#allocation8 + $0x18] sm:$0xf]
    %v259 = vld [vmem:[#allocation8 + $0x1c] sm:$0xf]
    %v260 = vld [vmem:[%s6] sm:$0x1]
    %v262 = vlaneseq
    %v263 = vshrl.u32 %v262, 7
    %v264 = vsub.s32 0, %v263
    %v265 = vrot.slane %v260, %v264
    %v275 = vunpack.c.l.b16 %v252
    %v276 = vunpack.c.l.b16 %v253
    %v277 = vunpack.c.l.b16 %v254
    %v278 = vunpack.c.l.b16 %v255
    %v279 = vunpack.c.l.b16 %v256
    %v280 = vunpack.c.l.b16 %v257
    %v281 = vunpack.c.l.b16 %v258
    %v282 = vunpack.c.l.b16 %v259
    %v283 = vpack.c.b16 %v276, %v275
    %v284 = vpack.c.b16 %v278, %v277
    %v285 = vpack.c.b16 %v280, %v279
    %v286 = vpack.c.b16 %v282, %v281
    %vm291 = vcmask 523264
    %v293 = vsel %vm291, %v251, 0
    %295 = vmatprep.subr.bf16.mxu0 0
    %296 = vmatpush1.bf16.msra.mxu0 %v283
    %297 = vmatprep.subr.bf16.mxu0 0
    %298 = vmatpush1.bf16.msra.mxu0 %v284
    %299 = vmatprep.subr.bf16.mxu0 0
    %300 = vmatpush1.bf16.msra.mxu0 %v285
    %301 = vmatprep.subr.bf16.mxu0 0
    %302 = vmatpush1.bf16.msra.mxu0 %v286
    %303 = vmatprep.subr.bf16.mxu0 0
    %304 = vmatpush1.bf16.msra.mxu0 0
    %305 = vmatprep.subr.bf16.mxu0 0
    %306 = vmatpush1.bf16.msra.mxu0 0
    %307 = vmatprep.subr.bf16.mxu0 0
    %308 = vmatpush1.bf16.msra.mxu0 0
    %309 = vmatprep.subr.bf16.mxu0 0
    %310 = vmatpush1.bf16.msra.mxu0 0
    %311 = vmatprep.subr.bf16.mxu0 0
    %312 = vmatpush1.bf16.msra.mxu0 0
    %313 = vmatprep.subr.bf16.mxu0 0
    %314 = vmatpush1.bf16.msra.mxu0 0
    %315 = vmatprep.subr.bf16.mxu0 0
    %316 = vmatpush1.bf16.msra.mxu0 0
    %317 = vmatprep.subr.bf16.mxu0 0
    %318 = vmatpush1.bf16.msra.mxu0 0
    %319 = vmatprep.subr.bf16.mxu0 0
    %320 = vmatpush1.bf16.msra.mxu0 0
    %321 = vmatprep.subr.bf16.mxu0 0
    %322 = vmatpush1.bf16.msra.mxu0 0
    %323 = vmatprep.subr.bf16.mxu0 0
    %324 = vmatpush1.bf16.msra.mxu0 0
    %325 = vmatprep.subr.bf16.mxu0 0
    %326 = vmatpush1.bf16.msra.mxu0 0
    %327 = vmatprep.mubr.bf16.mxu0 0
    %328 = vmatmul.mubr.bf16.gmra.mrb[0].mxu0 %v293
    %v329 = vpop.f32.mrb[0].mxu0
    %v330 = vadd.f32 %v265, %v329
    %v331 = vpop.f32.mrb[0].mxu0
    %v332 = vpop.f32.mrb[0].mxu0
    %v333 = vpop.f32.mrb[0].mxu0
    %334 = vdwg.mxu0
    %v335 = vmax.f32 %v330, 0.0
    %v336 = vpack.c.bf16 %v335, %v335
    %v337 = vld [vmem:[#allocation10] sm:$0xff]
    %v338 = vld [vmem:[#allocation10 + $0x8] sm:$0xff]
    %v339 = vld [vmem:[#allocation10 + $0x10] sm:$0xff]
    %v340 = vld [vmem:[#allocation10 + $0x18] sm:$0xff]
    %v341 = vld [vmem:[#allocation10 + $0x20] sm:$0xff]
    %v342 = vld [vmem:[#allocation10 + $0x28] sm:$0xff]
    %v343 = vld [vmem:[#allocation10 + $0x30] sm:$0xff]
    %v344 = vld [vmem:[#allocation10 + $0x38] sm:$0xff]
    %v345 = vld [vmem:[#allocation10 + $0x40] sm:$0xff]
    %v346 = vld [vmem:[#allocation10 + $0x48] sm:$0xff]
    %v347 = vld [vmem:[#allocation10 + $0x50] sm:$0xff]
    %v348 = vld [vmem:[#allocation10 + $0x58] sm:$0xff]
    %v349 = vld [vmem:[#allocation10 + $0x60] sm:$0xff]
    %v350 = vld [vmem:[#allocation10 + $0x68] sm:$0xff]
    %v351 = vld [vmem:[#allocation10 + $0x70] sm:$0xff]
    %v352 = vld [vmem:[#allocation10 + $0x78] sm:$0xff]
    %v353 = vld [vmem:[%s8] sm:$0x3]
    %v355 = vlaneseq
    %v356 = vshrl.u32 %v355, 7
    %v357 = vsub.s32 0, %v356
    %v358 = vrot.slane %v353, %v357
    %v359 = vlaneseq
    %v360 = vshrl.u32 %v359, 7
    %v361 = vsub.s32 1, %v360
    %v362 = vrot.slane %v353, %v361
    %v381 = vunpack.c.l.b16 %v337
    %v382 = vunpack.c.h.b16 %v337
    %v383 = vunpack.c.l.b16 %v338
    %v384 = vunpack.c.h.b16 %v338
    %v385 = vunpack.c.l.b16 %v339
    %v386 = vunpack.c.h.b16 %v339
    %v387 = vunpack.c.l.b16 %v340
    %v388 = vunpack.c.h.b16 %v340
    %v389 = vunpack.c.l.b16 %v341
    %v390 = vunpack.c.h.b16 %v341
    %v391 = vunpack.c.l.b16 %v342
    %v392 = vunpack.c.h.b16 %v342
    %v393 = vunpack.c.l.b16 %v343
    %v394 = vunpack.c.h.b16 %v343
    %v395 = vunpack.c.l.b16 %v344
    %v396 = vunpack.c.h.b16 %v344
    %v397 = vunpack.c.l.b16 %v345
    %v398 = vunpack.c.h.b16 %v345
    %v399 = vunpack.c.l.b16 %v346
    %v400 = vunpack.c.h.b16 %v346
    %v401 = vunpack.c.l.b16 %v347
    %v402 = vunpack.c.h.b16 %v347
    %v403 = vunpack.c.l.b16 %v348
    %v404 = vunpack.c.h.b16 %v348
    %v405 = vunpack.c.l.b16 %v349
    %v406 = vunpack.c.h.b16 %v349
    %v407 = vunpack.c.l.b16 %v350
    %v408 = vunpack.c.h.b16 %v350
    %v409 = vunpack.c.l.b16 %v351
    %v410 = vunpack.c.h.b16 %v351
    %v411 = vunpack.c.l.b16 %v352
    %v412 = vunpack.c.h.b16 %v352
    %v413 = vpack.c.b16 %v383, %v381
    %v414 = vpack.c.b16 %v384, %v382
    %v415 = vpack.c.b16 %v387, %v385
    %v416 = vpack.c.b16 %v388, %v386
    %v417 = vpack.c.b16 %v391, %v389
    %v418 = vpack.c.b16 %v392, %v390
    %v419 = vpack.c.b16 %v395, %v393
    %v420 = vpack.c.b16 %v396, %v394
    %v421 = vpack.c.b16 %v399, %v397
    %v422 = vpack.c.b16 %v400, %v398
    %v423 = vpack.c.b16 %v403, %v401
    %v424 = vpack.c.b16 %v404, %v402
    %v425 = vpack.c.b16 %v407, %v405
    %v426 = vpack.c.b16 %v408, %v406
    %v427 = vpack.c.b16 %v411, %v409
    %v428 = vpack.c.b16 %v412, %v410
    %445 = vmatprep.subr.bf16.mxu0 %v414
    %446 = vmatpush1.bf16.msra.mxu0 %v413
    %447 = vmatprep.subr.bf16.mxu0 %v416
    %448 = vmatpush1.bf16.msra.mxu0 %v415
    %449 = vmatprep.subr.bf16.mxu0 %v418
    %450 = vmatpush1.bf16.msra.mxu0 %v417
    %451 = vmatprep.subr.bf16.mxu0 %v420
    %452 = vmatpush1.bf16.msra.mxu0 %v419
    %453 = vmatprep.subr.bf16.mxu0 %v422
    %454 = vmatpush1.bf16.msra.mxu0 %v421
    %455 = vmatprep.subr.bf16.mxu0 %v424
    %456 = vmatpush1.bf16.msra.mxu0 %v423
    %457 = vmatprep.subr.bf16.mxu0 %v426
    %458 = vmatpush1.bf16.msra.mxu0 %v425
    %459 = vmatprep.subr.bf16.mxu0 %v428
    %460 = vmatpush1.bf16.msra.mxu0 %v427
    %461 = vmatprep.subr.bf16.mxu0 0
    %462 = vmatpush1.bf16.msra.mxu0 0
    %463 = vmatprep.subr.bf16.mxu0 0
    %464 = vmatpush1.bf16.msra.mxu0 0
    %465 = vmatprep.subr.bf16.mxu0 0
    %466 = vmatpush1.bf16.msra.mxu0 0
    %467 = vmatprep.subr.bf16.mxu0 0
    %468 = vmatpush1.bf16.msra.mxu0 0
    %469 = vmatprep.subr.bf16.mxu0 0
    %470 = vmatpush1.bf16.msra.mxu0 0
    %471 = vmatprep.subr.bf16.mxu0 0
    %472 = vmatpush1.bf16.msra.mxu0 0
    %473 = vmatprep.subr.bf16.mxu0 0
    %474 = vmatpush1.bf16.msra.mxu0 0
    %475 = vmatprep.subr.bf16.mxu0 0
    %476 = vmatpush1.bf16.msra.mxu0 0
    %477 = vmatprep.mubr.bf16.mxu0 0
    %478 = vmatmul.mubr.bf16.gmra.mrb[0].mxu0 %v336
    %v479 = vpop.f32.mrb[0].mxu0
    %v480 = vadd.f32 %v358, %v479
    %v481 = vpop.f32.mrb[0].mxu0
    %v482 = vadd.f32 %v362, %v481
    %v483 = vpop.f32.mrb[0].mxu0
    %v484 = vpop.f32.mrb[0].mxu0
    %485 = vdwg.mxu0
    %v486 = vmax.f32 %v480, 0.0
    %v487 = vmax.f32 %v482, 0.0
    %v488 = vpack.c.bf16 %v486, %v486
    %v489 = vpack.c.bf16 %v487, %v487
    %v490 = vld [vmem:[#allocation11] sm:$0xff]
    %v491 = vld [vmem:[#allocation11 + $0x8] sm:$0xf]
    %v492 = vld [vmem:[#allocation11 + $0xc] sm:$0xff]
    %v493 = vld [vmem:[#allocation11 + $0x14] sm:$0xf]
    %v494 = vld [vmem:[#allocation11 + $0x18] sm:$0xff]
    %v495 = vld [vmem:[#allocation11 + $0x20] sm:$0xf]
    %v496 = vld [vmem:[#allocation11 + $0x24] sm:$0xff]
    %v497 = vld [vmem:[#allocation11 + $0x2c] sm:$0xf]
    %v498 = vld [vmem:[#allocation11 + $0x30] sm:$0xff]
    %v499 = vld [vmem:[#allocation11 + $0x38] sm:$0xf]
    %v500 = vld [vmem:[#allocation11 + $0x3c] sm:$0xff]
    %v501 = vld [vmem:[#allocation11 + $0x44] sm:$0xf]
    %v502 = vld [vmem:[#allocation11 + $0x48] sm:$0xff]
    %v503 = vld [vmem:[#allocation11 + $0x50] sm:$0xf]
    %v504 = vld [vmem:[#allocation11 + $0x54] sm:$0xff]
    %v505 = vld [vmem:[#allocation11 + $0x5c] sm:$0xf]
    %v506 = vld [vmem:[#allocation11 + $0x60] sm:$0xff]
    %v507 = vld [vmem:[#allocation11 + $0x68] sm:$0xf]
    %v508 = vld [vmem:[#allocation11 + $0x6c] sm:$0xff]
    %v509 = vld [vmem:[#allocation11 + $0x74] sm:$0xf]
    %v510 = vld [vmem:[#allocation11 + $0x78] sm:$0xff]
    %v511 = vld [vmem:[#allocation11 + $0x80] sm:$0xf]
    %v512 = vld [vmem:[#allocation11 + $0x84] sm:$0xff]
    %v513 = vld [vmem:[#allocation11 + $0x8c] sm:$0xf]
    %v514 = vld [vmem:[#allocation11 + $0x90] sm:$0xff]
    %v515 = vld [vmem:[#allocation11 + $0x98] sm:$0xf]
    %v516 = vld [vmem:[#allocation11 + $0x9c] sm:$0xff]
    %v517 = vld [vmem:[#allocation11 + $0xa4] sm:$0xf]
    %v518 = vld [vmem:[#allocation11 + $0xa8] sm:$0xff]
    %v519 = vld [vmem:[#allocation11 + $0xb0] sm:$0xf]
    %v520 = vld [vmem:[#allocation11 + $0xb4] sm:$0xff]
    %v521 = vld [vmem:[#allocation11 + $0xbc] sm:$0xf]
    %v522 = vld [vmem:[#allocation11 + $0xc0] sm:$0xff]
    %v523 = vld [vmem:[#allocation11 + $0xc8] sm:$0xf]
    %v524 = vld [vmem:[#allocation11 + $0xcc] sm:$0xff]
    %v525 = vld [vmem:[#allocation11 + $0xd4] sm:$0xf]
    %v526 = vld [vmem:[#allocation11 + $0xd8] sm:$0xff]
    %v527 = vld [vmem:[#allocation11 + $0xe0] sm:$0xf]
    %v528 = vld [vmem:[#allocation11 + $0xe4] sm:$0xff]
    %v529 = vld [vmem:[#allocation11 + $0xec] sm:$0xf]
    %v530 = vld [vmem:[#allocation11 + $0xf0] sm:$0xff]
    %v531 = vld [vmem:[#allocation11 + $0xf8] sm:$0xf]
    %v532 = vld [vmem:[#allocation11 + $0xfc] sm:$0xff]
    %v533 = vld [vmem:[#allocation11 + $0x104] sm:$0xf]
    %v534 = vld [vmem:[#allocation11 + $0x108] sm:$0xff]
    %v535 = vld [vmem:[#allocation11 + $0x110] sm:$0xf]
    %v536 = vld [vmem:[#allocation11 + $0x114] sm:$0xff]
    %v537 = vld [vmem:[#allocation11 + $0x11c] sm:$0xf]
    %v538 = vld [vmem:[#allocation11 + $0x120] sm:$0xff]
    %v539 = vld [vmem:[#allocation11 + $0x128] sm:$0xf]
    %v540 = vld [vmem:[#allocation11 + $0x12c] sm:$0xff]
    %v541 = vld [vmem:[#allocation11 + $0x134] sm:$0xf]
    %v542 = vld [vmem:[#allocation11 + $0x138] sm:$0xff]
    %v543 = vld [vmem:[#allocation11 + $0x140] sm:$0xf]
    %v544 = vld [vmem:[#allocation11 + $0x144] sm:$0xff]
    %v545 = vld [vmem:[#allocation11 + $0x14c] sm:$0xf]
    %v546 = vld [vmem:[#allocation11 + $0x150] sm:$0xff]
    %v547 = vld [vmem:[#allocation11 + $0x158] sm:$0xf]
    %v548 = vld [vmem:[#allocation11 + $0x15c] sm:$0xff]
    %v549 = vld [vmem:[#allocation11 + $0x164] sm:$0xf]
    %v550 = vld [vmem:[#allocation11 + $0x168] sm:$0xff]
    %v551 = vld [vmem:[#allocation11 + $0x170] sm:$0xf]
    %v552 = vld [vmem:[#allocation11 + $0x174] sm:$0xff]
    %v553 = vld [vmem:[#allocation11 + $0x17c] sm:$0xf]
    %v554 = vld [vmem:[%s10] sm:$0x7]
    %v556 = vlaneseq
    %v557 = vshrl.u32 %v556, 7
    %v558 = vsub.s32 0, %v557
    %v559 = vrot.slane %v554, %v558
    %v560 = vlaneseq
    %v561 = vshrl.u32 %v560, 7
    %v562 = vsub.s32 1, %v561
    %v563 = vrot.slane %v554, %v562
    %v564 = vlaneseq
    %v565 = vshrl.u32 %v564, 7
    %v566 = vsub.s32 2, %v565
    %v567 = vrot.slane %v554, %v566
    %v635 = vunpack.c.l.b16 %v490
    %v636 = vunpack.c.h.b16 %v490
    %v637 = vunpack.c.l.b16 %v491
    %v638 = vunpack.c.l.b16 %v492
    %v639 = vunpack.c.h.b16 %v492
    %v640 = vunpack.c.l.b16 %v493
    %v641 = vunpack.c.l.b16 %v494
    %v642 = vunpack.c.h.b16 %v494
    %v643 = vunpack.c.l.b16 %v495
    %v644 = vunpack.c.l.b16 %v496
    %v645 = vunpack.c.h.b16 %v496
    %v646 = vunpack.c.l.b16 %v497
    %v647 = vunpack.c.l.b16 %v498
    %v648 = vunpack.c.h.b16 %v498
    %v649 = vunpack.c.l.b16 %v499
    %v650 = vunpack.c.l.b16 %v500
    %v651 = vunpack.c.h.b16 %v500
    %v652 = vunpack.c.l.b16 %v501
    %v653 = vunpack.c.l.b16 %v502
    %v654 = vunpack.c.h.b16 %v502
    %v655 = vunpack.c.l.b16 %v503
    %v656 = vunpack.c.l.b16 %v504
    %v657 = vunpack.c.h.b16 %v504
    %v658 = vunpack.c.l.b16 %v505
    %v659 = vunpack.c.l.b16 %v506
    %v660 = vunpack.c.h.b16 %v506
    %v661 = vunpack.c.l.b16 %v507
    %v662 = vunpack.c.l.b16 %v508
    %v663 = vunpack.c.h.b16 %v508
    %v664 = vunpack.c.l.b16 %v509
    %v665 = vunpack.c.l.b16 %v510
    %v666 = vunpack.c.h.b16 %v510
    %v667 = vunpack.c.l.b16 %v511
    %v668 = vunpack.c.l.b16 %v512
    %v669 = vunpack.c.h.b16 %v512
    %v670 = vunpack.c.l.b16 %v513
    %v671 = vunpack.c.l.b16 %v514
    %v672 = vunpack.c.h.b16 %v514
    %v673 = vunpack.c.l.b16 %v515
    %v674 = vunpack.c.l.b16 %v516
    %v675 = vunpack.c.h.b16 %v516
    %v676 = vunpack.c.l.b16 %v517
    %v677 = vunpack.c.l.b16 %v518
    %v678 = vunpack.c.h.b16 %v518
    %v679 = vunpack.c.l.b16 %v519
    %v680 = vunpack.c.l.b16 %v520
    %v681 = vunpack.c.h.b16 %v520
    %v682 = vunpack.c.l.b16 %v521
    %v683 = vunpack.c.l.b16 %v522
    %v684 = vunpack.c.h.b16 %v522
    %v685 = vunpack.c.l.b16 %v523
    %v686 = vunpack.c.l.b16 %v524
    %v687 = vunpack.c.h.b16 %v524
    %v688 = vunpack.c.l.b16 %v525
    %v689 = vunpack.c.l.b16 %v526
    %v690 = vunpack.c.h.b16 %v526
    %v691 = vunpack.c.l.b16 %v527
    %v692 = vunpack.c.l.b16 %v528
    %v693 = vunpack.c.h.b16 %v528
    %v694 = vunpack.c.l.b16 %v529
    %v695 = vunpack.c.l.b16 %v530
    %v696 = vunpack.c.h.b16 %v530
    %v697 = vunpack.c.l.b16 %v531
    %v698 = vunpack.c.l.b16 %v532
    %v699 = vunpack.c.h.b16 %v532
    %v700 = vunpack.c.l.b16 %v533
    %v701 = vunpack.c.l.b16 %v534
    %v702 = vunpack.c.h.b16 %v534
    %v703 = vunpack.c.l.b16 %v535
    %v704 = vunpack.c.l.b16 %v536
    %v705 = vunpack.c.h.b16 %v536
    %v706 = vunpack.c.l.b16 %v537
    %v707 = vunpack.c.l.b16 %v538
    %v708 = vunpack.c.h.b16 %v538
    %v709 = vunpack.c.l.b16 %v539
    %v710 = vunpack.c.l.b16 %v540
    %v711 = vunpack.c.h.b16 %v540
    %v712 = vunpack.c.l.b16 %v541
    %v713 = vunpack.c.l.b16 %v542
    %v714 = vunpack.c.h.b16 %v542
    %v715 = vunpack.c.l.b16 %v543
    %v716 = vunpack.c.l.b16 %v544
    %v717 = vunpack.c.h.b16 %v544
    %v718 = vunpack.c.l.b16 %v545
    %v719 = vunpack.c.l.b16 %v546
    %v720 = vunpack.c.h.b16 %v546
    %v721 = vunpack.c.l.b16 %v547
    %v722 = vunpack.c.l.b16 %v548
    %v723 = vunpack.c.h.b16 %v548
    %v724 = vunpack.c.l.b16 %v549
    %v725 = vunpack.c.l.b16 %v550
    %v726 = vunpack.c.h.b16 %v550
    %v727 = vunpack.c.l.b16 %v551
    %v728 = vunpack.c.l.b16 %v552
    %v729 = vunpack.c.h.b16 %v552
    %v730 = vunpack.c.l.b16 %v553
    %v731 = vpack.c.b16 %v638, %v635
    %v732 = vpack.c.b16 %v639, %v636
    %v733 = vpack.c.b16 %v640, %v637
    %v734 = vpack.c.b16 %v644, %v641
    %v735 = vpack.c.b16 %v645, %v642
    %v736 = vpack.c.b16 %v646, %v643
    %v737 = vpack.c.b16 %v650, %v647
    %v738 = vpack.c.b16 %v651, %v648
    %v739 = vpack.c.b16 %v652, %v649
    %v740 = vpack.c.b16 %v656, %v653
    %v741 = vpack.c.b16 %v657, %v654
    %v742 = vpack.c.b16 %v658, %v655
    %v743 = vpack.c.b16 %v662, %v659
    %v744 = vpack.c.b16 %v663, %v660
    %v745 = vpack.c.b16 %v664, %v661
    %v746 = vpack.c.b16 %v668, %v665
    %v747 = vpack.c.b16 %v669, %v666
    %v748 = vpack.c.b16 %v670, %v667
    %v749 = vpack.c.b16 %v674, %v671
    %v750 = vpack.c.b16 %v675, %v672
    %v751 = vpack.c.b16 %v676, %v673
    %v752 = vpack.c.b16 %v680, %v677
    %v753 = vpack.c.b16 %v681, %v678
    %v754 = vpack.c.b16 %v682, %v679
    %v755 = vpack.c.b16 %v686, %v683
    %v756 = vpack.c.b16 %v687, %v684
    %v757 = vpack.c.b16 %v688, %v685
    %v758 = vpack.c.b16 %v692, %v689
    %v759 = vpack.c.b16 %v693, %v690
    %v760 = vpack.c.b16 %v694, %v691
    %v761 = vpack.c.b16 %v698, %v695
    %v762 = vpack.c.b16 %v699, %v696
    %v763 = vpack.c.b16 %v700, %v697
    %v764 = vpack.c.b16 %v704, %v701
    %v765 = vpack.c.b16 %v705, %v702
    %v766 = vpack.c.b16 %v706, %v703
    %v767 = vpack.c.b16 %v710, %v707
    %v768 = vpack.c.b16 %v711, %v708
    %v769 = vpack.c.b16 %v712, %v709
    %v770 = vpack.c.b16 %v716, %v713
    %v771 = vpack.c.b16 %v717, %v714
    %v772 = vpack.c.b16 %v718, %v715
    %v773 = vpack.c.b16 %v722, %v719
    %v774 = vpack.c.b16 %v723, %v720
    %v775 = vpack.c.b16 %v724, %v721
    %v776 = vpack.c.b16 %v728, %v725
    %v777 = vpack.c.b16 %v729, %v726
    %v778 = vpack.c.b16 %v730, %v727
    %827 = vmatprep.subr.bf16.mxu0 %v732
    %828 = vmatpush1.bf16.msra.mxu0 %v731
    %829 = vmatprep.subr.bf16.mxu0 %v735
    %830 = vmatpush1.bf16.msra.mxu0 %v734
    %831 = vmatprep.subr.bf16.mxu0 %v738
    %832 = vmatpush1.bf16.msra.mxu0 %v737
    %833 = vmatprep.subr.bf16.mxu0 %v741
    %834 = vmatpush1.bf16.msra.mxu0 %v740
    %835 = vmatprep.subr.bf16.mxu0 %v744
    %836 = vmatpush1.bf16.msra.mxu0 %v743
    %837 = vmatprep.subr.bf16.mxu0 %v747
    %838 = vmatpush1.bf16.msra.mxu0 %v746
    %839 = vmatprep.subr.bf16.mxu0 %v750
    %840 = vmatpush1.bf16.msra.mxu0 %v749
    %841 = vmatprep.subr.bf16.mxu0 %v753
    %842 = vmatpush1.bf16.msra.mxu0 %v752
    %843 = vmatprep.subr.bf16.mxu0 %v756
    %844 = vmatpush1.bf16.msra.mxu0 %v755
    %845 = vmatprep.subr.bf16.mxu0 %v759
    %846 = vmatpush1.bf16.msra.mxu0 %v758
    %847 = vmatprep.subr.bf16.mxu0 %v762
    %848 = vmatpush1.bf16.msra.mxu0 %v761
    %849 = vmatprep.subr.bf16.mxu0 %v765
    %850 = vmatpush1.bf16.msra.mxu0 %v764
    %851 = vmatprep.subr.bf16.mxu0 %v768
    %852 = vmatpush1.bf16.msra.mxu0 %v767
    %853 = vmatprep.subr.bf16.mxu0 %v771
    %854 = vmatpush1.bf16.msra.mxu0 %v770
    %855 = vmatprep.subr.bf16.mxu0 %v774
    %856 = vmatpush1.bf16.msra.mxu0 %v773
    %857 = vmatprep.subr.bf16.mxu0 %v777
    %858 = vmatpush1.bf16.msra.mxu0 %v776
    %859 = vmatprep.mubr.bf16.mxu0 %v489
    %860 = vmatmul.mubr.bf16.gmra.mrb[0].mxu0 %v488
    %v861 = vpop.f32.mrb[0].mxu0
    %v862 = vadd.f32 %v559, %v861
    %v863 = vpop.f32.mrb[0].mxu0
    %v864 = vadd.f32 %v563, %v863
    %v865 = vpop.f32.mrb[0].mxu0
    %v866 = vpop.f32.mrb[0].mxu0
    %867 = vdwg.mxu0
    %868 = vmatprep.subr.bf16.mxu0 0
    %869 = vmatpush1.bf16.msra.mxu0 %v733
    %870 = vmatprep.subr.bf16.mxu0 0
    %871 = vmatpush1.bf16.msra.mxu0 %v736
    %872 = vmatprep.subr.bf16.mxu0 0
    %873 = vmatpush1.bf16.msra.mxu0 %v739
    %874 = vmatprep.subr.bf16.mxu0 0
    %875 = vmatpush1.bf16.msra.mxu0 %v742
    %876 = vmatprep.subr.bf16.mxu0 0
    %877 = vmatpush1.bf16.msra.mxu0 %v745
    %878 = vmatprep.subr.bf16.mxu0 0
    %879 = vmatpush1.bf16.msra.mxu0 %v748
    %880 = vmatprep.subr.bf16.mxu0 0
    %881 = vmatpush1.bf16.msra.mxu0 %v751
    %882 = vmatprep.subr.bf16.mxu0 0
    %883 = vmatpush1.bf16.msra.mxu0 %v754
    %884 = vmatprep.subr.bf16.mxu0 0
    %885 = vmatpush1.bf16.msra.mxu0 %v757
    %886 = vmatprep.subr.bf16.mxu0 0
    %887 = vmatpush1.bf16.msra.mxu0 %v760
    %888 = vmatprep.subr.bf16.mxu0 0
    %889 = vmatpush1.bf16.msra.mxu0 %v763
    %890 = vmatprep.subr.bf16.mxu0 0
    %891 = vmatpush1.bf16.msra.mxu0 %v766
    %892 = vmatprep.subr.bf16.mxu0 0
    %893 = vmatpush1.bf16.msra.mxu0 %v769
    %894 = vmatprep.subr.bf16.mxu0 0
    %895 = vmatpush1.bf16.msra.mxu0 %v772
    %896 = vmatprep.subr.bf16.mxu0 0
    %897 = vmatpush1.bf16.msra.mxu0 %v775
    %898 = vmatprep.subr.bf16.mxu0 0
    %899 = vmatpush1.bf16.msra.mxu0 %v778
    %900 = vmatprep.mubr.bf16.mxu0 %v489
    %901 = vmatmul.mubr.bf16.gmra.mrb[0].mxu0 %v488
    %v902 = vpop.f32.mrb[0].mxu0
    %v903 = vadd.f32 %v567, %v902
    %v904 = vpop.f32.mrb[0].mxu0
    %v905 = vpop.f32.mrb[0].mxu0
    %v906 = vpop.f32.mrb[0].mxu0
    %907 = vdwg.mxu0
    %v908 = vpack.c.bf16 %v862, %v862
    %v909 = vpack.c.bf16 %v864, %v864
    %v910 = vpack.c.bf16 %v903, %v903
    %v914 = vunpack.c.l.b16 %v908
    %v915 = vunpack.c.l.b16 %v909
    %v916 = vunpack.c.l.b16 %v910
    %v917 = vpack.c.b16 %v915, %v914
    %v918 = vpack.c.b16 %v916, %v916
    %921 = vst [vmem:[#allocation13] sm:$0xff] %v917
    %922 = vst [vmem:[#allocation13 + $0x8] sm:$0xf] %v918
    // Predicated region
    $region70: #{tpu_custom_call.1} parent=1 // pred_check
      _
    $region71: #{tpu_custom_call.1} parent=1 // pred_check_branch
      %924 = sbr.rel (0) target = $region73
    $region72: #{tpu_custom_call.1} parent=1 // pred_region
      %s926 = ssub.s32 192, 192
      %927 = vsyncadd [#allocation4], %s926
      %s929 = sshll.u32 [#allocation13], 4
      %s930 = int_to_ptr.vmem [resolvable:$true] %s929
      %932 = dma.vmem_to_hbm [thread:$0]  %s930, 192, %s11, [#allocation4]
    $region73: #{tpu_custom_call.1} parent=1 // pred_fallthru
      _
    // Predicated region
    $region74: #{tpu_custom_call.1} parent=1 // pred_check
      _
    $region75: #{tpu_custom_call.1} parent=1 // pred_check_branch
      %934 = sbr.rel (0) target = $region77
    $region76: #{tpu_custom_call.1} parent=1 // pred_region
      %935 = dma.done [#allocation4], 192
    $region77: #{tpu_custom_call.1} parent=1 // pred_fallthru
      _
    %936 = vsyncpa [#allocation3], 1
    %937 = vsyncpa [#allocation6], 1
    %938 = vsyncpa [#allocation9], 1
    %939 = vsyncpa [#allocation12], 1
    %940 = vsyncpa [#allocation4], 1

</llo_original>
